<compile_context>
chip_gen: v5e
topology: v5e:2x2
jax: 0.10.0
libtpu: 0.0.40
codegen_flags: <defaults>
</compile_context>

<pallas_src>
import jax
import jax.numpy as jnp
from jax.experimental import pallas as pl
from jax.experimental.pallas import tpu as pltpu


_MAX_TILE_B = 8192  # hard cap: keeps double-buffered x/out + intermediates well under scoped VMEM


def _round_up(n, m):
    return ((n + m - 1) // m) * m


def _choose_tile_b(batch, tile_b):
    """Pick the batch tile: 8-row aligned, VMEM-safe, and >=2 grid steps when B allows."""
    t = _round_up(max(int(tile_b), 8), 8)
    t = min(t, _MAX_TILE_B)
    t = min(t, _round_up(batch, 8))          # never larger than the (rounded) batch
    half = _round_up(pl.cdiv(batch, 2), 8)   # prefer an even >=2-step grid for v7x megacore
    if half < _round_up(batch, 8):
        t = min(t, half)
    return max(t, 8)


def make_mlp_kernel(n_mxu_layers):
    """Fused kernel: bf16 MXU hidden layers -> VPU bottleneck -> VPU decoder -> slice stores."""

    def kernel(*refs):
        # refs = (x, [W_h0, b_h0, ...], W_bott_T, b_bott, W_dec, b_dec, out)
        x_ref = refs[0]
        out_ref = refs[-1]
        p = refs[1:-1]

        def sigmoid(z):
            # sigmoid(z) == 0.5 * tanh(z/2) + 0.5 : one EUP op instead of exp + divide.
            return 0.5 * jnp.tanh(0.5 * z) + 0.5

        # x arrives as f32 straight from HBM; cast to bf16 in-kernel for the MXU path.
        h = x_ref[...].astype(jnp.bfloat16)                     # (TILE_B, D)

        # Hidden encoder layers: Linear + Sigmoid on the MXU (bf16 operands, f32 acc).
        for i in range(n_mxu_layers):
            w = p[2 * i][...]                                   # (in, out) bf16
            b = p[2 * i + 1][...]                               # (1, out)  f32
            z = jnp.dot(h, w, preferred_element_type=jnp.float32) + b
            h = sigmoid(z).astype(jnp.bfloat16)

        # Bottleneck encoder layer (output width 1): N=1 matmul done on the VPU
        # as an elementwise multiply + lane reduce (weight pre-transposed to (1, K)).
        wl = p[2 * n_mxu_layers][...]                           # (1, K) f32
        bl = p[2 * n_mxu_layers + 1][...]                       # (1, 1) f32
        z = jnp.sum(h.astype(jnp.float32) * wl, axis=-1, keepdims=True) + bl
        bott = sigmoid(z)                                       # (TILE_B, 1) f32

        # Decoder Linear(1, out_dim) + Sigmoid: K=1 matmul as a VPU broadcast.
        wd = p[2 * n_mxu_layers + 2][...]                       # (1, out_dim) f32
        bd = p[2 * n_mxu_layers + 3][...]                       # (1, out_dim) f32
        dec = sigmoid(bott * wd + bd)                           # (TILE_B, out_dim) f32

        # torch.cat((bottleneck, decoded), dim=1) via two direct slice stores.
        out_ref[:, :1] = bott
        out_ref[:, 1:] = dec

    return kernel


def mlp_forward(x, params, tile_b=4096):
    """params: list of (W, b) with W shaped (in_dim, out_dim); last entry is the decoder.

    Returns (B, 1 + out_dim) f32: column 0 is the 1-d bottleneck, columns 1.. are the
    sigmoid-decoded output (matches torch.cat((x, out), 1)).
    """
    B, D = x.shape
    n_encoder_layers = len(params) - 1
    n_mxu_layers = n_encoder_layers - 1          # all hidden layers except the ->1 bottleneck
    out_dim = params[-1][0].shape[1]

    tile_b = _choose_tile_b(B, tile_b)
    grid = pl.cdiv(B, tile_b)                    # no padding: boundary block is masked by Pallas

    # Flatten parameters in the order the kernel expects.
    flat_args = []
    for i in range(n_mxu_layers):
        w, b = params[i]
        flat_args.append(w.astype(jnp.bfloat16))
        flat_args.append(b.astype(jnp.float32))
    wl, bl = params[n_encoder_layers - 1]        # (K, 1), (1, 1)
    flat_args.append(wl.T.astype(jnp.float32))   # pre-transpose to (1, K) for the VPU path
    flat_args.append(jnp.asarray(bl, jnp.float32).reshape(1, 1))
    wd, bd = params[-1]                          # (1, out_dim), (1, out_dim)
    flat_args.append(wd.astype(jnp.float32))
    flat_args.append(bd.astype(jnp.float32))

    # Weights/biases: full-array blocks with constant index_map -> VMEM-resident.
    param_specs = [pl.BlockSpec(a.shape, lambda i: (0, 0)) for a in flat_args]
    in_specs = [pl.BlockSpec((tile_b, D), lambda i: (i, 0))] + param_specs
    out_specs = pl.BlockSpec((tile_b, 1 + out_dim), lambda i: (i, 0))

    # Raise the scoped-VMEM limit (v5e defaults to 16 MiB) so large tiles fit; scale
    # with tile_b but stay far below v7x's 64 MiB physical VMEM.
    vmem_limit = int(min(48 << 20, max(32 << 20, 6 * 1024 * tile_b)))

    out = pl.pallas_call(
        make_mlp_kernel(n_mxu_layers),
        out_shape=jax.ShapeDtypeStruct((B, 1 + out_dim), jnp.float32),
        grid_spec=pltpu.PrefetchScalarGridSpec(
            num_scalar_prefetch=0,
            grid=(grid,),
            in_specs=in_specs,
            out_specs=out_specs,
        ),
        compiler_params=pltpu.CompilerParams(
            dimension_semantics=("parallel",),   # lets v7x shard batch tiles across both TCs
            vmem_limit_bytes=vmem_limit,
        ),
    )(x, *flat_args)

    return out


def init_params(key, input_dim, hiddendim, outputdim):
    """Deterministic synthetic init mirroring the PyTorch module's layer shapes."""
    params = []
    dims = hiddendim + [1]                       # encoder output dims (last encoder layer -> 1)
    indim = input_dim
    for d in dims:
        key, kw, kb = jax.random.split(key, 3)
        bound = 1.0 / float(indim) ** 0.5
        w = jax.random.uniform(kw, (indim, d), jnp.float32, -bound, bound)
        b = jax.random.uniform(kb, (1, d), jnp.float32, -bound, bound)
        params.append((w, b))
        indim = d
    # Decoder: Linear(1, outputdim)
    key, kw, kb = jax.random.split(key, 3)
    wd = jax.random.uniform(kw, (1, outputdim), jnp.float32, -1.0, 1.0)
    bd = jax.random.uniform(kb, (1, outputdim), jnp.float32, -1.0, 1.0)
    params.append((wd, bd))
    return params


def mlp_reference(x, params):
    """Pure-JAX f32 reference of the PyTorch forward."""
    h = x
    for w, b in params[:-1]:
        h = jax.nn.sigmoid(h @ w + b)
    wd, bd = params[-1]
    o = jax.nn.sigmoid(h @ wd + bd)
    return jnp.concatenate([h, o], axis=1)


if __name__ == "__main__":
    # Shapes consistent with the module: input_dim=128 (dim in the script),
    # hiddendim=[32, 16], outputdim=4.
    input_dim = 128
    hiddendim = [32, 16]
    outputdim = 4

    key = jax.random.PRNGKey(0)
    key, kx = jax.random.split(key)
    params = init_params(key, input_dim, hiddendim, outputdim)

    # Small batch (single-tile path, tile == batch).
    batch = 8
    x = jax.random.normal(kx, (batch, input_dim), jnp.float32)
    out = jax.block_until_ready(mlp_forward(x, params))
    ref = mlp_reference(x, params)
    assert out.shape == (batch, 1 + outputdim), out.shape
    # bf16 MXU operands -> looser tolerance than pure-f32 (sigmoid outputs in [0, 1]).
    assert jnp.allclose(out, ref, atol=2e-2, rtol=0.0), "mismatch vs reference (small batch)"

    # Non-tile-multiple batch: default heuristic splits into a 2-step grid and
    # exercises the masked partial boundary block (no wrapper-side padding).
    key, kx2 = jax.random.split(key)
    batch2 = 300
    x2 = jax.random.normal(kx2, (batch2, input_dim), jnp.float32)
    out2 = jax.block_until_ready(mlp_forward(x2, params))
    ref2 = mlp_reference(x2, params)
    assert out2.shape == (batch2, 1 + outputdim), out2.shape
    assert jnp.allclose(out2, ref2, atol=2e-2, rtol=0.0), "mismatch vs reference (gridded batch)"

    # Explicit small tile: 3-step grid over the same batch, also masked at the boundary.
    out3 = jax.block_until_ready(mlp_forward(x2, params, tile_b=128))
    assert out3.shape == (batch2, 1 + outputdim), out3.shape
    assert jnp.allclose(out3, ref2, atol=2e-2, rtol=0.0), "mismatch vs reference (small tiles)"

    print("KERNEL_OK")
</pallas_src>

<mosaic_0001>
module attributes {stable_mosaic.version = 11 : i64} {
  func.func @kernel(%arg0: i32, %arg1: memref<8x128xf32, #tpu.memory_space<vmem>>, %arg2: memref<128x32xbf16, #tpu.memory_space<vmem>>, %arg3: memref<1x32xf32, #tpu.memory_space<vmem>>, %arg4: memref<32x16xbf16, #tpu.memory_space<vmem>>, %arg5: memref<1x16xf32, #tpu.memory_space<vmem>>, %arg6: memref<1x16xf32, #tpu.memory_space<vmem>>, %arg7: memref<1x1xf32, #tpu.memory_space<vmem>>, %arg8: memref<1x4xf32, #tpu.memory_space<vmem>>, %arg9: memref<1x4xf32, #tpu.memory_space<vmem>>, %arg10: memref<8x5xf32, #tpu.memory_space<vmem>>) attributes {dimension_semantics = [#tpu.dimension_semantics<parallel>], iteration_bounds = array<i64: 1>, scalar_prefetch = 0 : i64, scratch_operands = 0 : i64, tpu.core_type = #tpu.core_type<tc>, window_params = [{transform_indices = @transform_0, window_bounds = array<i64: 8, 128>}, {pipeline_mode = #tpu.pipeline_mode<synchronous>, transform_indices = @transform_1, window_bounds = array<i64: 128, 32>}, {pipeline_mode = #tpu.pipeline_mode<synchronous>, transform_indices = @transform_2, window_bounds = array<i64: 1, 32>}, {pipeline_mode = #tpu.pipeline_mode<synchronous>, transform_indices = @transform_3, window_bounds = array<i64: 32, 16>}, {pipeline_mode = #tpu.pipeline_mode<synchronous>, transform_indices = @transform_4, window_bounds = array<i64: 1, 16>}, {pipeline_mode = #tpu.pipeline_mode<synchronous>, transform_indices = @transform_5, window_bounds = array<i64: 1, 16>}, {pipeline_mode = #tpu.pipeline_mode<synchronous>, transform_indices = @transform_6, window_bounds = array<i64: 1, 1>}, {pipeline_mode = #tpu.pipeline_mode<synchronous>, transform_indices = @transform_7, window_bounds = array<i64: 1, 4>}, {pipeline_mode = #tpu.pipeline_mode<synchronous>, transform_indices = @transform_8, window_bounds = array<i64: 1, 4>}, {transform_indices = @transform_9, window_bounds = array<i64: 8, 5>}]} {
    %c0 = arith.constant 0 : index
    %c0_0 = arith.constant 0 : index
    %0 = vector.load %arg1[%c0, %c0_0] : memref<8x128xf32, #tpu.memory_space<vmem>>, vector<8x128xf32>
    %1 = arith.truncf %0 : vector<8x128xf32> to vector<8x128xbf16>
    %c0_1 = arith.constant 0 : index
    %c0_2 = arith.constant 0 : index
    %2 = vector.load %arg2[%c0_1, %c0_2] : memref<128x32xbf16, #tpu.memory_space<vmem>>, vector<128x32xbf16>
    %c0_3 = arith.constant 0 : index
    %c0_4 = arith.constant 0 : index
    %3 = vector.load %arg3[%c0_3, %c0_4] : memref<1x32xf32, #tpu.memory_space<vmem>>, vector<1x32xf32>
    %cst = arith.constant dense<0.000000e+00> : vector<8x32xf32>
    %4 = tpu.matmul %1, %2, %cst {dimension_numbers = #tpu.dot_dimension_numbers<[1], [0], [0], [1], [0, 0, 1, 1], [], []>} : vector<8x128xbf16>, vector<128x32xbf16>, vector<8x32xf32> -> vector<8x32xf32>
    %5 = vector.broadcast %3 : vector<1x32xf32> to vector<8x32xf32>
    %6 = arith.addf %4, %5 : vector<8x32xf32>
    %cst_5 = arith.constant 5.000000e-01 : f32
    %7 = vector.broadcast %cst_5 : f32 to vector<8x32xf32>
    %8 = arith.mulf %7, %6 : vector<8x32xf32>
    %9 = math.tanh %8 : vector<8x32xf32>
    %cst_6 = arith.constant 5.000000e-01 : f32
    %10 = vector.broadcast %cst_6 : f32 to vector<8x32xf32>
    %11 = arith.mulf %10, %9 : vector<8x32xf32>
    %cst_7 = arith.constant 5.000000e-01 : f32
    %12 = vector.broadcast %cst_7 : f32 to vector<8x32xf32>
    %13 = arith.addf %11, %12 : vector<8x32xf32>
    %14 = arith.truncf %13 : vector<8x32xf32> to vector<8x32xbf16>
    %c0_8 = arith.constant 0 : index
    %c0_9 = arith.constant 0 : index
    %15 = vector.load %arg4[%c0_8, %c0_9] : memref<32x16xbf16, #tpu.memory_space<vmem>>, vector<32x16xbf16>
    %c0_10 = arith.constant 0 : index
    %c0_11 = arith.constant 0 : index
    %16 = vector.load %arg5[%c0_10, %c0_11] : memref<1x16xf32, #tpu.memory_space<vmem>>, vector<1x16xf32>
    %cst_12 = arith.constant dense<0.000000e+00> : vector<8x16xf32>
    %17 = tpu.matmul %14, %15, %cst_12 {dimension_numbers = #tpu.dot_dimension_numbers<[1], [0], [0], [1], [0, 0, 1, 1], [], []>} : vector<8x32xbf16>, vector<32x16xbf16>, vector<8x16xf32> -> vector<8x16xf32>
    %18 = vector.broadcast %16 : vector<1x16xf32> to vector<8x16xf32>
    %19 = arith.addf %17, %18 : vector<8x16xf32>
    %cst_13 = arith.constant 5.000000e-01 : f32
    %20 = vector.broadcast %cst_13 : f32 to vector<8x16xf32>
    %21 = arith.mulf %20, %19 : vector<8x16xf32>
    %22 = math.tanh %21 : vector<8x16xf32>
    %cst_14 = arith.constant 5.000000e-01 : f32
    %23 = vector.broadcast %cst_14 : f32 to vector<8x16xf32>
    %24 = arith.mulf %23, %22 : vector<8x16xf32>
    %cst_15 = arith.constant 5.000000e-01 : f32
    %25 = vector.broadcast %cst_15 : f32 to vector<8x16xf32>
    %26 = arith.addf %24, %25 : vector<8x16xf32>
    %27 = arith.truncf %26 : vector<8x16xf32> to vector<8x16xbf16>
    %c0_16 = arith.constant 0 : index
    %c0_17 = arith.constant 0 : index
    %28 = vector.load %arg6[%c0_16, %c0_17] : memref<1x16xf32, #tpu.memory_space<vmem>>, vector<1x16xf32>
    %c0_18 = arith.constant 0 : index
    %c0_19 = arith.constant 0 : index
    %29 = vector.load %arg7[%c0_18, %c0_19] : memref<1x1xf32, #tpu.memory_space<vmem>>, vector<1x1xf32>
    %30 = arith.extf %27 : vector<8x16xbf16> to vector<8x16xf32>
    %31 = vector.broadcast %28 : vector<1x16xf32> to vector<8x16xf32>
    %32 = arith.mulf %30, %31 : vector<8x16xf32>
    %cst_20 = arith.constant dense<0.000000e+00> : vector<8xf32>
    %33 = vector.multi_reduction <add>, %32, %cst_20 [1] : vector<8x16xf32> to vector<8xf32>
    %34 = vector.shape_cast %33 : vector<8xf32> to vector<8x1xf32>
    %35 = vector.broadcast %29 : vector<1x1xf32> to vector<8x1xf32>
    %36 = arith.addf %34, %35 : vector<8x1xf32>
    %cst_21 = arith.constant 5.000000e-01 : f32
    %37 = vector.broadcast %cst_21 : f32 to vector<8x1xf32>
    %38 = arith.mulf %37, %36 : vector<8x1xf32>
    %39 = math.tanh %38 : vector<8x1xf32>
    %cst_22 = arith.constant 5.000000e-01 : f32
    %40 = vector.broadcast %cst_22 : f32 to vector<8x1xf32>
    %41 = arith.mulf %40, %39 : vector<8x1xf32>
    %cst_23 = arith.constant 5.000000e-01 : f32
    %42 = vector.broadcast %cst_23 : f32 to vector<8x1xf32>
    %43 = arith.addf %41, %42 : vector<8x1xf32>
    %c0_24 = arith.constant 0 : index
    %c0_25 = arith.constant 0 : index
    %44 = vector.load %arg8[%c0_24, %c0_25] : memref<1x4xf32, #tpu.memory_space<vmem>>, vector<1x4xf32>
    %c0_26 = arith.constant 0 : index
    %c0_27 = arith.constant 0 : index
    %45 = vector.load %arg9[%c0_26, %c0_27] : memref<1x4xf32, #tpu.memory_space<vmem>>, vector<1x4xf32>
    %46 = vector.broadcast %43 : vector<8x1xf32> to vector<8x4xf32>
    %47 = vector.broadcast %44 : vector<1x4xf32> to vector<8x4xf32>
    %48 = arith.mulf %46, %47 : vector<8x4xf32>
    %49 = vector.broadcast %45 : vector<1x4xf32> to vector<8x4xf32>
    %50 = arith.addf %48, %49 : vector<8x4xf32>
    %cst_28 = arith.constant 5.000000e-01 : f32
    %51 = vector.broadcast %cst_28 : f32 to vector<8x4xf32>
    %52 = arith.mulf %51, %50 : vector<8x4xf32>
    %53 = math.tanh %52 : vector<8x4xf32>
    %cst_29 = arith.constant 5.000000e-01 : f32
    %54 = vector.broadcast %cst_29 : f32 to vector<8x4xf32>
    %55 = arith.mulf %54, %53 : vector<8x4xf32>
    %cst_30 = arith.constant 5.000000e-01 : f32
    %56 = vector.broadcast %cst_30 : f32 to vector<8x4xf32>
    %57 = arith.addf %55, %56 : vector<8x4xf32>
    %c0_31 = arith.constant 0 : index
    %c0_32 = arith.constant 0 : index
    %58 = vector.load %arg10[%c0_31, %c0_32] : memref<8x5xf32, #tpu.memory_space<vmem>>, vector<8x1xf32>
    tpu.vector_store %arg10[%c0_31, %c0_32], %43 {strides = array<i32>} : memref<8x5xf32, #tpu.memory_space<vmem>>, vector<8x1xf32>,
    %c0_33 = arith.constant 0 : index
    %c1 = arith.constant 1 : index
    %59 = vector.load %arg10[%c0_33, %c1] : memref<8x5xf32, #tpu.memory_space<vmem>>, vector<8x4xf32>
    tpu.vector_store %arg10[%c0_33, %c1], %57 {strides = array<i32>} : memref<8x5xf32, #tpu.memory_space<vmem>>, vector<8x4xf32>,
    return
  }
  func.func @transform_0(%arg0: i32) -> (i32, i32) {
    %c0_i32 = arith.constant 0 : i32
    %c0_i32_0 = arith.constant 0 : i32
    return %arg0, %c0_i32 : i32, i32
  }
  func.func @transform_1(%arg0: i32) -> (i32, i32) {
    %c0_i32 = arith.constant 0 : i32
    %c0_i32_0 = arith.constant 0 : i32
    %c0_i32_1 = arith.constant 0 : i32
    return %c0_i32, %c0_i32_0 : i32, i32
  }
  func.func @transform_2(%arg0: i32) -> (i32, i32) {
    %c0_i32 = arith.constant 0 : i32
    %c0_i32_0 = arith.constant 0 : i32
    %c0_i32_1 = arith.constant 0 : i32
    return %c0_i32, %c0_i32_0 : i32, i32
  }
  func.func @transform_3(%arg0: i32) -> (i32, i32) {
    %c0_i32 = arith.constant 0 : i32
    %c0_i32_0 = arith.constant 0 : i32
    %c0_i32_1 = arith.constant 0 : i32
    return %c0_i32, %c0_i32_0 : i32, i32
  }
  func.func @transform_4(%arg0: i32) -> (i32, i32) {
    %c0_i32 = arith.constant 0 : i32
    %c0_i32_0 = arith.constant 0 : i32
    %c0_i32_1 = arith.constant 0 : i32
    return %c0_i32, %c0_i32_0 : i32, i32
  }
  func.func @transform_5(%arg0: i32) -> (i32, i32) {
    %c0_i32 = arith.constant 0 : i32
    %c0_i32_0 = arith.constant 0 : i32
    %c0_i32_1 = arith.constant 0 : i32
    return %c0_i32, %c0_i32_0 : i32, i32
  }
  func.func @transform_6(%arg0: i32) -> (i32, i32) {
    %c0_i32 = arith.constant 0 : i32
    %c0_i32_0 = arith.constant 0 : i32
    %c0_i32_1 = arith.constant 0 : i32
    return %c0_i32, %c0_i32_0 : i32, i32
  }
  func.func @transform_7(%arg0: i32) -> (i32, i32) {
    %c0_i32 = arith.constant 0 : i32
    %c0_i32_0 = arith.constant 0 : i32
    %c0_i32_1 = arith.constant 0 : i32
    return %c0_i32, %c0_i32_0 : i32, i32
  }
  func.func @transform_8(%arg0: i32) -> (i32, i32) {
    %c0_i32 = arith.constant 0 : i32
    %c0_i32_0 = arith.constant 0 : i32
    %c0_i32_1 = arith.constant 0 : i32
    return %c0_i32, %c0_i32_0 : i32, i32
  }
  func.func @transform_9(%arg0: i32) -> (i32, i32) {
    %c0_i32 = arith.constant 0 : i32
    %c0_i32_0 = arith.constant 0 : i32
    return %arg0, %c0_i32 : i32, i32
  }
}

</mosaic_0001>

<llo_original>
// kernel: tpu_custom_call.1
$region0: #{tpu_custom_call.1}
  #allocation0 [shape = 'u32[]', space=smem, size = 0x4, offset = 0x4, fixed_abs, tag = 'smem constant byte address 0x4 - core index']
  #allocation1 [shape = 'u32[72,128]{1,0:T(1,128)}', space=vmem, size = 0x9000, scoped, tag = 'internal scratch']
  #allocation2 [shape = 'f32[1,1]{1,0:T(1,128)S(1)}', space=vmem, size = 0x200, scoped, tag = 'scoped memory for tpu_custom_call.1']
  %s0 = inlined_call_operand.vmem [shape: f32[8,128], index: 0, kind: input, shape index: {}]
  %s1 = inlined_call_operand.vmem [shape: bf16[128,32], index: 1, kind: input, shape index: {}]
  %s2 = inlined_call_operand.vmem [shape: f32[1,32], index: 2, kind: input, shape index: {}]
  %s3 = inlined_call_operand.vmem [shape: bf16[32,16], index: 3, kind: input, shape index: {}]
  %s4 = inlined_call_operand.vmem [shape: f32[1,16], index: 4, kind: input, shape index: {}]
  %s5 = inlined_call_operand.vmem [shape: f32[1,16], index: 5, kind: input, shape index: {}]
  %s6 = inlined_call_operand.<no memory space> [shape: f32[1,1], index: 6, kind: input, shape index: {}]
  %s7 = inlined_call_operand.vmem [shape: f32[1,4], index: 7, kind: input, shape index: {}]
  %s8 = inlined_call_operand.vmem [shape: f32[1,4], index: 8, kind: input, shape index: {}]
  %s9 = inlined_call_operand.hbm [shape: f32[8,5], index: 9, kind: output, shape index: {}]
  %s10 = sld [smem:[#allocation0]]
  $region46: #{tpu_custom_call.1} parent=0
    _
  %s12 = ssub.s32 1, %s10
  %s13 = scalar_select 0, %s12, %s10
  %v14 = vstv %s6
  %15 = vst [vmem:[#allocation2] sm:$0x1] %v14
  $region1: #{tpu_custom_call.1} parent=0
    #allocation3 [shape = 'u8[4096]{0}', space=vmem, size = 0x1000, scoped, tag = 'output window, operand 0, single buffered']
    #allocation4 [shape = 's32[1]{0}', space=sflag, size = 0x4, scoped, tag = 'scoped memory for tpu_custom_call.1']
    %16 = vsyncpa [#allocation4], 0
    // Predicated region
    $region2: #{tpu_custom_call.1} parent=1 // pred_check
      _
    $region3: #{tpu_custom_call.1} parent=1 // pred_check_branch
      %18 = sbr.rel (0) target = $region5
    $region4: #{tpu_custom_call.1} parent=1 // pred_region
      _
    $region5: #{tpu_custom_call.1} parent=1 // pred_fallthru
      _
    // Predicated region
    $region6: #{tpu_custom_call.1} parent=1 // pred_check
      _
    $region7: #{tpu_custom_call.1} parent=1 // pred_check_branch
      %20 = sbr.rel (0) target = $region9
    $region8: #{tpu_custom_call.1} parent=1 // pred_region
      _
    $region9: #{tpu_custom_call.1} parent=1 // pred_fallthru
      _
    // Predicated region
    $region10: #{tpu_custom_call.1} parent=1 // pred_check
      _
    $region11: #{tpu_custom_call.1} parent=1 // pred_check_branch
      %22 = sbr.rel (0) target = $region13
    $region12: #{tpu_custom_call.1} parent=1 // pred_region
      _
    $region13: #{tpu_custom_call.1} parent=1 // pred_fallthru
      _
    // Predicated region
    $region14: #{tpu_custom_call.1} parent=1 // pred_check
      _
    $region15: #{tpu_custom_call.1} parent=1 // pred_check_branch
      %24 = sbr.rel (0) target = $region17
    $region16: #{tpu_custom_call.1} parent=1 // pred_region
      _
    $region17: #{tpu_custom_call.1} parent=1 // pred_fallthru
      _
    // Predicated region
    $region18: #{tpu_custom_call.1} parent=1 // pred_check
      _
    $region19: #{tpu_custom_call.1} parent=1 // pred_check_branch
      %26 = sbr.rel (0) target = $region21
    $region20: #{tpu_custom_call.1} parent=1 // pred_region
      _
    $region21: #{tpu_custom_call.1} parent=1 // pred_fallthru
      _
    // Predicated region
    $region22: #{tpu_custom_call.1} parent=1 // pred_check
      _
    $region23: #{tpu_custom_call.1} parent=1 // pred_check_branch
      %28 = sbr.rel (0) target = $region25
    $region24: #{tpu_custom_call.1} parent=1 // pred_region
      _
    $region25: #{tpu_custom_call.1} parent=1 // pred_fallthru
      _
    // Predicated region
    $region26: #{tpu_custom_call.1} parent=1 // pred_check
      _
    $region27: #{tpu_custom_call.1} parent=1 // pred_check_branch
      %30 = sbr.rel (0) target = $region29
    $region28: #{tpu_custom_call.1} parent=1 // pred_region
      _
    $region29: #{tpu_custom_call.1} parent=1 // pred_fallthru
      _
    // Predicated region
    $region30: #{tpu_custom_call.1} parent=1 // pred_check
      _
    $region31: #{tpu_custom_call.1} parent=1 // pred_check_branch
      %32 = sbr.rel (0) target = $region33
    $region32: #{tpu_custom_call.1} parent=1 // pred_region
      _
    $region33: #{tpu_custom_call.1} parent=1 // pred_fallthru
      _
    // Predicated region
    $region34: #{tpu_custom_call.1} parent=1 // pred_check
      _
    $region35: #{tpu_custom_call.1} parent=1 // pred_check_branch
      %34 = sbr.rel (0) target = $region37
    $region36: #{tpu_custom_call.1} parent=1 // pred_region
      _
    $region37: #{tpu_custom_call.1} parent=1 // pred_fallthru
      _
    %v36 = vld [vmem:[%s0] sm:$0xff]
    %v37 = vpack.c.bf16 %v36, %v36
    %v38 = vld [vmem:[%s1] sm:$0xf]
    %v39 = vld [vmem:[%s1 + $0x4] sm:$0xf]
    %v40 = vld [vmem:[%s1 + $0x8] sm:$0xf]
    %v41 = vld [vmem:[%s1 + $0xc] sm:$0xf]
    %v42 = vld [vmem:[%s1 + $0x10] sm:$0xf]
    %v43 = vld [vmem:[%s1 + $0x14] sm:$0xf]
    %v44 = vld [vmem:[%s1 + $0x18] sm:$0xf]
    %v45 = vld [vmem:[%s1 + $0x1c] sm:$0xf]
    %v46 = vld [vmem:[%s1 + $0x20] sm:$0xf]
    %v47 = vld [vmem:[%s1 + $0x24] sm:$0xf]
    %v48 = vld [vmem:[%s1 + $0x28] sm:$0xf]
    %v49 = vld [vmem:[%s1 + $0x2c] sm:$0xf]
    %v50 = vld [vmem:[%s1 + $0x30] sm:$0xf]
    %v51 = vld [vmem:[%s1 + $0x34] sm:$0xf]
    %v52 = vld [vmem:[%s1 + $0x38] sm:$0xf]
    %v53 = vld [vmem:[%s1 + $0x3c] sm:$0xf]
    %v54 = vld [vmem:[%s2] sm:$0x1]
    %v56 = vperm.slane %v54, 0
    %v74 = vunpack.c.l.b16 %v38
    %v75 = vunpack.c.l.b16 %v39
    %v76 = vunpack.c.l.b16 %v40
    %v77 = vunpack.c.l.b16 %v41
    %v78 = vunpack.c.l.b16 %v42
    %v79 = vunpack.c.l.b16 %v43
    %v80 = vunpack.c.l.b16 %v44
    %v81 = vunpack.c.l.b16 %v45
    %v82 = vunpack.c.l.b16 %v46
    %v83 = vunpack.c.l.b16 %v47
    %v84 = vunpack.c.l.b16 %v48
    %v85 = vunpack.c.l.b16 %v49
    %v86 = vunpack.c.l.b16 %v50
    %v87 = vunpack.c.l.b16 %v51
    %v88 = vunpack.c.l.b16 %v52
    %v89 = vunpack.c.l.b16 %v53
    %v90 = vpack.c.b16 %v75, %v74
    %v91 = vpack.c.b16 %v77, %v76
    %v92 = vpack.c.b16 %v79, %v78
    %v93 = vpack.c.b16 %v81, %v80
    %v94 = vpack.c.b16 %v83, %v82
    %v95 = vpack.c.b16 %v85, %v84
    %v96 = vpack.c.b16 %v87, %v86
    %v97 = vpack.c.b16 %v89, %v88
    %106 = vmatpush.bf16.msra.mxu0 %v97
    %107 = vmatpush.bf16.msra.mxu0 %v96
    %108 = vmatpush.bf16.msra.mxu0 %v95
    %109 = vmatpush.bf16.msra.mxu0 %v94
    %110 = vmatpush.bf16.msra.mxu0 %v93
    %111 = vmatpush.bf16.msra.mxu0 %v92
    %112 = vmatpush.bf16.msra.mxu0 %v91
    %113 = vmatpush.bf16.msra.mxu0 %v90
    %114 = vmatmul.bf16.gmra.mxu0 %v37
    %v115 = vpop.f32.mrf.mxu0
    %v116 = vadd.f32 %v56, %v115
    %v117 = vpop.f32.mrf.mxu0
    %118 = vdwg.mxu0
    %v119 = vmul.f32 %v116, 0.5
    %v120 = vtanh.pop %v119
    %v121 = vmul.f32 %v120, 0.5
    %v122 = vadd.f32 %v121, 0.5
    %v123 = vpack.c.bf16 %v122, %v122
    %v124 = vld [vmem:[%s3] sm:$0xf]
    %v125 = vld [vmem:[%s3 + $0x4] sm:$0xf]
    %v126 = vld [vmem:[%s3 + $0x8] sm:$0xf]
    %v127 = vld [vmem:[%s3 + $0xc] sm:$0xf]
    %v128 = vld [vmem:[%s4] sm:$0x1]
    %v130 = vperm.slane %v128, 0
    %v136 = vunpack.c.l.b16 %v124
    %v137 = vunpack.c.l.b16 %v125
    %v138 = vunpack.c.l.b16 %v126
    %v139 = vunpack.c.l.b16 %v127
    %v140 = vpack.c.b16 %v137, %v136
    %v141 = vpack.c.b16 %v139, %v138
    %vm144 = vcmask 261120
    %v146 = vsel %vm144, %v123, 0
    %148 = vmatpush.bf16.msra.mxu0 0
    %149 = vmatpush.bf16.msra.mxu0 0
    %150 = vmatpush.bf16.msra.mxu0 0
    %151 = vmatpush.bf16.msra.mxu0 0
    %152 = vmatpush.bf16.msra.mxu0 0
    %153 = vmatpush.bf16.msra.mxu0 0
    %154 = vmatpush.bf16.msra.mxu0 %v141
    %155 = vmatpush.bf16.msra.mxu0 %v140
    %156 = vmatmul.bf16.gmra.mxu0 %v146
    %v157 = vpop.f32.mrf.mxu0
    %v158 = vadd.f32 %v130, %v157
    %v159 = vpop.f32.mrf.mxu0
    %160 = vdwg.mxu0
    %v161 = vmul.f32 %v158, 0.5
    %v162 = vtanh.pop %v161
    %v163 = vmul.f32 %v162, 0.5
    %v164 = vadd.f32 %v163, 0.5
    %v165 = vpack.c.bf16 %v164, %v164
    %v166 = vld [vmem:[%s5] sm:$0x1]
    %v167 = vld [vmem:[#allocation2] sm:$0x1]
    %v168 = vunpack.c.l.bf16 %v165
    %v170 = vperm.slane %v166, 0
    %v172 = vmul.f32 %v168, %v170
    %vm173 = vcmask 130048
    %v174 = vsel %vm173, %v172, 0.0
    %175 = vadd.xlane.f32.xlu0 %v174
    %v176 = vpop.xlane.xlu0 %175
    %v178 = vperm.slane %v167, 0
    %v180 = vadd.f32 %v176, %v178
    %v181 = vmul.f32 %v180, 0.5
    %v182 = vtanh.pop %v181
    %v183 = vmul.f32 %v182, 0.5
    %v184 = vadd.f32 %v183, 0.5
    %v185 = vld [vmem:[%s7] sm:$0x1]
    %v186 = vld [vmem:[%s8] sm:$0x1]
    %188 = vset.pattern.permute.xlu0 0
    %189 = vperm.xlu0 %188, %v184
    %v190 = vpop.permute.xlu0 %189
    %v193 = vperm.slane %v185, 0
    %v195 = vmul.f32 %v190, %v193
    %v197 = vperm.slane %v186, 0
    %v199 = vadd.f32 %v195, %v197
    %v200 = vmul.f32 %v199, 0.5
    %v201 = vtanh.pop %v200
    %v202 = vmul.f32 %v201, 0.5
    %v203 = vadd.f32 %v202, 0.5
    %vm204 = vcmask 7168
    %205 = vst.msk [vmem:[#allocation3] sm:$0xff] %vm204, %v184
    %207 = vrot.lane.b32.xlu0 %v203, 1
    %v208 = vpop.permute.xlu0 %207
    %vm210 = vcmask 39944
    %211 = vst.msk [vmem:[#allocation3] sm:$0xff] %vm210, %v208
    // Predicated region
    $region38: #{tpu_custom_call.1} parent=1 // pred_check
      _
    $region39: #{tpu_custom_call.1} parent=1 // pred_check_branch
      %213 = sbr.rel (0) target = $region41
    $region40: #{tpu_custom_call.1} parent=1 // pred_region
      %215 = vsyncadd [#allocation4], 0
      %s217 = sshll.u32 [#allocation3], 4
      %s218 = int_to_ptr.vmem [resolvable:$true] %s217
      %s219 = sshll.u32 %s9, 4
      %s220 = int_to_ptr.hbm [resolvable:$true] %s219
      %222 = dma.vmem_to_hbm [thread:$0]  %s218, 128, %s220, [#allocation4]
    $region41: #{tpu_custom_call.1} parent=1 // pred_fallthru
      _
    // Predicated region
    $region42: #{tpu_custom_call.1} parent=1 // pred_check
      _
    $region43: #{tpu_custom_call.1} parent=1 // pred_check_branch
      %224 = sbr.rel (0) target = $region45
    $region44: #{tpu_custom_call.1} parent=1 // pred_region
      %226 = dma.done [#allocation4], 128
    $region45: #{tpu_custom_call.1} parent=1 // pred_fallthru
      _
    %227 = vsyncpa [#allocation4], 1

</llo_original>
